<compile_context>
chip_gen: v7x
topology: tpu7x:2x2x1
jax: 0.10.0
libtpu: 0.0.40
codegen_flags: <defaults>
</compile_context>

<pallas_src>
import functools

import jax
import jax.numpy as jnp
from jax.experimental import pallas as pl
from jax.experimental.pallas import tpu as pltpu

LN_EPS = 1e-5  # PyTorch nn.LayerNorm default


# ----------------------------------------------------------------------------
# Fused kernel: one batch tile through the whole MLP
# ----------------------------------------------------------------------------
def _fused_mlp_kernel(num_blocks, x_ref, *refs):
    """refs = [w0, b0, g0, beta0, ..., w_last, b_last, out_ref].

    x and all weights arrive as bf16; biases / LN params are f32.  Activations
    stay in registers/VMEM between layers; only the final (tile_b, out_pad)
    lane-dense result is written back to HBM.
    """
    o_ref = refs[-1]
    p = refs[:-1]

    h = x_ref[...]  # bf16, fed straight to the first MXU dot

    for blk in range(num_blocks):
        w_ref, b_ref, g_ref, beta_ref = p[4 * blk: 4 * blk + 4]

        # MXU matmul: bf16 inputs, f32 accumulation.
        z = jnp.dot(h, w_ref[...], preferred_element_type=jnp.float32)
        z = z + b_ref[...]  # bias broadcast over batch rows (f32)

        # LayerNorm over the feature dim (biased variance, matches torch).
        mean = jnp.mean(z, axis=-1, keepdims=True)
        c = z - mean
        var = jnp.mean(c * c, axis=-1, keepdims=True)
        z = c * jax.lax.rsqrt(var + LN_EPS) * g_ref[...] + beta_ref[...]

        # ReLU; Dropout == identity in eval mode. Cast once for the next dot.
        h = jnp.maximum(z, 0.0).astype(jnp.bfloat16)

    # Final projection (Linear, no norm / activation). Columns are zero-padded
    # to a multiple of 128 so the HBM store is lane-dense.
    w_ref, b_ref = p[4 * num_blocks], p[4 * num_blocks + 1]
    out = jnp.dot(h, w_ref[...], preferred_element_type=jnp.float32) + b_ref[...]
    o_ref[...] = out.astype(o_ref.dtype)


# ----------------------------------------------------------------------------
# Wrapper
# ----------------------------------------------------------------------------
def _round_up(x, m):
    return ((x + m - 1) // m) * m


def _choose_tile_b(batch):
    # Fewer, fatter batch tiles amortize the ~0.35us per-grid-step overhead and
    # give the MXU a taller M; the batch is padded up to a multiple of the tile
    # so the (8,128) constraint always holds and VMEM stays bounded.
    b8 = max(8, _round_up(batch, 8))
    for t in (512, 256, 128, 64, 32, 16, 8):
        if b8 >= t:
            return t
    return b8


def _resident_spec(shape):
    # Full-array block, same block for every grid step -> stays VMEM-resident.
    return pl.BlockSpec(shape, lambda i: tuple(0 for _ in shape))


def mlp_forward_pallas(params, x):
    blocks = params["blocks"]
    num_blocks = len(blocks)
    B, input_dim = x.shape
    output_dim = params["final_w"].shape[1]

    tile_b = _choose_tile_b(B)
    B_pad = _round_up(B, tile_b)
    K_pad = _round_up(input_dim, 128)     # pad first-matmul K (zero-cost math)
    out_pad = _round_up(output_dim, 128)  # lane-dense output slab

    # --- parameter prep: weights bf16 (halves DMA + resident VMEM),
    #     bias / LN params stay f32 for the f32 elementwise path.
    flat_params = []
    for li, (w, b, g, beta) in enumerate(blocks):
        w_bf = w.astype(jnp.bfloat16)
        if li == 0 and K_pad != input_dim:
            w_bf = jnp.pad(w_bf, ((0, K_pad - input_dim), (0, 0)))
        flat_params += [w_bf, b.astype(jnp.float32), g.astype(jnp.float32),
                        beta.astype(jnp.float32)]
    fw = jnp.pad(params["final_w"].astype(jnp.bfloat16),
                 ((0, 0), (0, out_pad - output_dim)))
    fb = jnp.pad(params["final_b"].astype(jnp.float32),
                 ((0, 0), (0, out_pad - output_dim)))
    flat_params += [fw, fb]

    # --- input prep: bf16, zero-pad batch and K.
    x_p = jnp.pad(x.astype(jnp.bfloat16),
                  ((0, B_pad - B), (0, K_pad - input_dim)))

    in_specs = [pl.BlockSpec((tile_b, K_pad), lambda i: (i, 0))]
    in_specs += [_resident_spec(p.shape) for p in flat_params]
    out_specs = pl.BlockSpec((tile_b, out_pad), lambda i: (i, 0))

    # Advisory cost estimate for XLA scheduling around the custom call.
    dims = [K_pad] + [w.shape[1] for (w, _, _, _) in blocks] + [out_pad]
    flops = 2 * B_pad * sum(dims[i] * dims[i + 1] for i in range(len(dims) - 1))
    param_bytes = sum(int(p.size) * p.dtype.itemsize for p in flat_params)
    bytes_accessed = 2 * B_pad * K_pad + 4 * B_pad * out_pad + param_bytes
    cost = pl.CostEstimate(flops=flops,
                           transcendentals=B_pad * num_blocks,  # rsqrt per row per LN
                           bytes_accessed=bytes_accessed)

    # Explicit VMEM budget: double-buffered I/O tiles + (double-buffered)
    # resident params + activation working set + slack, capped under the
    # v7x 64 MiB physical ceiling.
    max_dim = max(dims)
    io_tile_bytes = tile_b * K_pad * 2 + tile_b * out_pad * 4
    act_bytes = 6 * tile_b * max_dim * 4
    vmem_need = 2 * io_tile_bytes + 2 * param_bytes + act_bytes + (4 << 20)
    vmem_limit = int(min(max(vmem_need, 32 << 20), 64 << 20))

    out_full = pl.pallas_call(
        functools.partial(_fused_mlp_kernel, num_blocks),
        out_shape=jax.ShapeDtypeStruct((B_pad, out_pad), jnp.float32),
        grid=(B_pad // tile_b,),
        in_specs=in_specs,
        out_specs=out_specs,
        compiler_params=pltpu.CompilerParams(
            dimension_semantics=("parallel",),  # megacore split on v7x
            vmem_limit_bytes=vmem_limit),
        cost_estimate=cost,
    )(x_p, *flat_params)

    return out_full[:B, :output_dim]


mlp_forward = jax.jit(mlp_forward_pallas)


# ----------------------------------------------------------------------------
# Params + reference
# ----------------------------------------------------------------------------
def init_mlp_params(key, input_dim, output_dim, hidden_dims):
    """Deterministic init mimicking the torch module's shapes.

    Linear: uniform(+-1/sqrt(fan_in)); LayerNorm: ones/zeros.
    Weights stored as [in, out] (transposed vs torch's [out, in]) for x @ W.
    """
    dims = [input_dim] + list(hidden_dims)
    params = {"blocks": []}
    for i in range(len(dims) - 1):
        d_in, d_out = dims[i], dims[i + 1]
        key, kw, kb = jax.random.split(key, 3)
        bound = 1.0 / (d_in ** 0.5)
        w = jax.random.uniform(kw, (d_in, d_out), jnp.float32, -bound, bound)
        b = jax.random.uniform(kb, (1, d_out), jnp.float32, -bound, bound)
        gamma = jnp.ones((1, d_out), jnp.float32)
        beta = jnp.zeros((1, d_out), jnp.float32)
        params["blocks"].append((w, b, gamma, beta))
    d_in, d_out = dims[-1], output_dim
    key, kw, kb = jax.random.split(key, 3)
    bound = 1.0 / (d_in ** 0.5)
    params["final_w"] = jax.random.uniform(kw, (d_in, d_out), jnp.float32, -bound, bound)
    params["final_b"] = jax.random.uniform(kb, (1, d_out), jnp.float32, -bound, bound)
    return params


def mlp_forward_ref(params, x):
    """Pure-JAX reference using the same precision recipe as the kernel
    (bf16 MXU inputs, f32 accumulation, f32 LN/ReLU, bf16 inter-layer
    activations) so the allclose tolerance can stay tight."""
    def mxu_dot(a_bf16, w):
        return jnp.dot(a_bf16, w.astype(jnp.bfloat16),
                       preferred_element_type=jnp.float32)

    h = x.astype(jnp.bfloat16)
    for (w, b, gamma, beta) in params["blocks"]:
        z = mxu_dot(h, w) + b
        mean = jnp.mean(z, axis=-1, keepdims=True)
        var = jnp.mean((z - mean) ** 2, axis=-1, keepdims=True)
        z = (z - mean) * jax.lax.rsqrt(var + LN_EPS) * gamma + beta
        h = jnp.maximum(z, 0.0).astype(jnp.bfloat16)
    return mxu_dot(h, params["final_w"]) + params["final_b"]


if __name__ == "__main__":
    key = jax.random.PRNGKey(0)
    kp, kx = jax.random.split(key)

    batch = 8
    input_dim = 32
    hidden_dims = [64, 32]
    output_dim = 8

    params = init_mlp_params(kp, input_dim, output_dim, hidden_dims)
    x = jax.random.normal(kx, (batch, input_dim), jnp.float32)

    out = mlp_forward(params, x)
    jax.block_until_ready(out)

    ref = mlp_forward_ref(params, x)
    assert out.shape == (batch, output_dim)
    # Same bf16/f32 precision recipe in kernel and reference -> only
    # reduction-order noise remains; 1e-3 is comfortably loose.
    assert jnp.allclose(out, ref, atol=1e-3, rtol=1e-3), "mismatch vs JAX reference"

    print("KERNEL_OK")
</pallas_src>

<mosaic_0001>
module attributes {stable_mosaic.version = 11 : i64} {
  func.func @_fused_mlp_kernel(%arg0: i32, %arg1: memref<8x128xbf16, #tpu.memory_space<vmem>>, %arg2: memref<128x64xbf16, #tpu.memory_space<vmem>>, %arg3: memref<1x64xf32, #tpu.memory_space<vmem>>, %arg4: memref<1x64xf32, #tpu.memory_space<vmem>>, %arg5: memref<1x64xf32, #tpu.memory_space<vmem>>, %arg6: memref<64x32xbf16, #tpu.memory_space<vmem>>, %arg7: memref<1x32xf32, #tpu.memory_space<vmem>>, %arg8: memref<1x32xf32, #tpu.memory_space<vmem>>, %arg9: memref<1x32xf32, #tpu.memory_space<vmem>>, %arg10: memref<32x128xbf16, #tpu.memory_space<vmem>>, %arg11: memref<1x128xf32, #tpu.memory_space<vmem>>, %arg12: memref<8x128xf32, #tpu.memory_space<vmem>>) attributes {dimension_semantics = [#tpu.dimension_semantics<parallel>], iteration_bounds = array<i64: 1>, scalar_prefetch = 0 : i64, scratch_operands = 0 : i64, tpu.core_type = #tpu.core_type<tc>, window_params = [{transform_indices = @transform_0, window_bounds = array<i64: 8, 128>}, {pipeline_mode = #tpu.pipeline_mode<synchronous>, transform_indices = @transform_1, window_bounds = array<i64: 128, 64>}, {pipeline_mode = #tpu.pipeline_mode<synchronous>, transform_indices = @transform_2, window_bounds = array<i64: 1, 64>}, {pipeline_mode = #tpu.pipeline_mode<synchronous>, transform_indices = @transform_3, window_bounds = array<i64: 1, 64>}, {pipeline_mode = #tpu.pipeline_mode<synchronous>, transform_indices = @transform_4, window_bounds = array<i64: 1, 64>}, {pipeline_mode = #tpu.pipeline_mode<synchronous>, transform_indices = @transform_5, window_bounds = array<i64: 64, 32>}, {pipeline_mode = #tpu.pipeline_mode<synchronous>, transform_indices = @transform_6, window_bounds = array<i64: 1, 32>}, {pipeline_mode = #tpu.pipeline_mode<synchronous>, transform_indices = @transform_7, window_bounds = array<i64: 1, 32>}, {pipeline_mode = #tpu.pipeline_mode<synchronous>, transform_indices = @transform_8, window_bounds = array<i64: 1, 32>}, {pipeline_mode = #tpu.pipeline_mode<synchronous>, transform_indices = @transform_9, window_bounds = array<i64: 32, 128>}, {pipeline_mode = #tpu.pipeline_mode<synchronous>, transform_indices = @transform_10, window_bounds = array<i64: 1, 128>}, {transform_indices = @transform_11, window_bounds = array<i64: 8, 128>}]} {
    %c0 = arith.constant 0 : index
    %c0_0 = arith.constant 0 : index
    %0 = vector.load %arg1[%c0, %c0_0] : memref<8x128xbf16, #tpu.memory_space<vmem>>, vector<8x128xbf16>
    %c0_1 = arith.constant 0 : index
    %c0_2 = arith.constant 0 : index
    %1 = vector.load %arg2[%c0_1, %c0_2] : memref<128x64xbf16, #tpu.memory_space<vmem>>, vector<128x64xbf16>
    %cst = arith.constant dense<0.000000e+00> : vector<8x64xf32>
    %2 = tpu.matmul %0, %1, %cst {dimension_numbers = #tpu.dot_dimension_numbers<[1], [0], [0], [1], [0, 0, 1, 1], [], []>} : vector<8x128xbf16>, vector<128x64xbf16>, vector<8x64xf32> -> vector<8x64xf32>
    %c0_3 = arith.constant 0 : index
    %c0_4 = arith.constant 0 : index
    %3 = vector.load %arg3[%c0_3, %c0_4] : memref<1x64xf32, #tpu.memory_space<vmem>>, vector<1x64xf32>
    %4 = vector.broadcast %3 : vector<1x64xf32> to vector<8x64xf32>
    %5 = arith.addf %2, %4 : vector<8x64xf32>
    %cst_5 = arith.constant dense<0.000000e+00> : vector<8xf32>
    %6 = vector.multi_reduction <add>, %5, %cst_5 [1] : vector<8x64xf32> to vector<8xf32>
    %7 = vector.shape_cast %6 : vector<8xf32> to vector<8x1xf32>
    %cst_6 = arith.constant 6.400000e+01 : f32
    %8 = vector.broadcast %cst_6 : f32 to vector<8x1xf32>
    %9 = arith.divf %7, %8 : vector<8x1xf32>
    %10 = vector.broadcast %9 : vector<8x1xf32> to vector<8x64xf32>
    %11 = arith.subf %5, %10 : vector<8x64xf32>
    %12 = arith.mulf %11, %11 : vector<8x64xf32>
    %cst_7 = arith.constant dense<0.000000e+00> : vector<8xf32>
    %13 = vector.multi_reduction <add>, %12, %cst_7 [1] : vector<8x64xf32> to vector<8xf32>
    %14 = vector.shape_cast %13 : vector<8xf32> to vector<8x1xf32>
    %cst_8 = arith.constant 6.400000e+01 : f32
    %15 = vector.broadcast %cst_8 : f32 to vector<8x1xf32>
    %16 = arith.divf %14, %15 : vector<8x1xf32>
    %cst_9 = arith.constant 9.99999974E-6 : f32
    %17 = vector.broadcast %cst_9 : f32 to vector<8x1xf32>
    %18 = arith.addf %16, %17 : vector<8x1xf32>
    %19 = math.rsqrt %18 : vector<8x1xf32>
    %20 = vector.broadcast %19 : vector<8x1xf32> to vector<8x64xf32>
    %21 = arith.mulf %11, %20 : vector<8x64xf32>
    %c0_10 = arith.constant 0 : index
    %c0_11 = arith.constant 0 : index
    %22 = vector.load %arg4[%c0_10, %c0_11] : memref<1x64xf32, #tpu.memory_space<vmem>>, vector<1x64xf32>
    %23 = vector.broadcast %22 : vector<1x64xf32> to vector<8x64xf32>
    %24 = arith.mulf %21, %23 : vector<8x64xf32>
    %c0_12 = arith.constant 0 : index
    %c0_13 = arith.constant 0 : index
    %25 = vector.load %arg5[%c0_12, %c0_13] : memref<1x64xf32, #tpu.memory_space<vmem>>, vector<1x64xf32>
    %26 = vector.broadcast %25 : vector<1x64xf32> to vector<8x64xf32>
    %27 = arith.addf %24, %26 : vector<8x64xf32>
    %cst_14 = arith.constant 0.000000e+00 : f32
    %28 = vector.broadcast %cst_14 : f32 to vector<8x64xf32>
    %29 = arith.maximumf %27, %28 : vector<8x64xf32>
    %30 = arith.truncf %29 : vector<8x64xf32> to vector<8x64xbf16>
    %c0_15 = arith.constant 0 : index
    %c0_16 = arith.constant 0 : index
    %31 = vector.load %arg6[%c0_15, %c0_16] : memref<64x32xbf16, #tpu.memory_space<vmem>>, vector<64x32xbf16>
    %cst_17 = arith.constant dense<0.000000e+00> : vector<8x32xf32>
    %32 = tpu.matmul %30, %31, %cst_17 {dimension_numbers = #tpu.dot_dimension_numbers<[1], [0], [0], [1], [0, 0, 1, 1], [], []>} : vector<8x64xbf16>, vector<64x32xbf16>, vector<8x32xf32> -> vector<8x32xf32>
    %c0_18 = arith.constant 0 : index
    %c0_19 = arith.constant 0 : index
    %33 = vector.load %arg7[%c0_18, %c0_19] : memref<1x32xf32, #tpu.memory_space<vmem>>, vector<1x32xf32>
    %34 = vector.broadcast %33 : vector<1x32xf32> to vector<8x32xf32>
    %35 = arith.addf %32, %34 : vector<8x32xf32>
    %cst_20 = arith.constant dense<0.000000e+00> : vector<8xf32>
    %36 = vector.multi_reduction <add>, %35, %cst_20 [1] : vector<8x32xf32> to vector<8xf32>
    %37 = vector.shape_cast %36 : vector<8xf32> to vector<8x1xf32>
    %cst_21 = arith.constant 3.200000e+01 : f32
    %38 = vector.broadcast %cst_21 : f32 to vector<8x1xf32>
    %39 = arith.divf %37, %38 : vector<8x1xf32>
    %40 = vector.broadcast %39 : vector<8x1xf32> to vector<8x32xf32>
    %41 = arith.subf %35, %40 : vector<8x32xf32>
    %42 = arith.mulf %41, %41 : vector<8x32xf32>
    %cst_22 = arith.constant dense<0.000000e+00> : vector<8xf32>
    %43 = vector.multi_reduction <add>, %42, %cst_22 [1] : vector<8x32xf32> to vector<8xf32>
    %44 = vector.shape_cast %43 : vector<8xf32> to vector<8x1xf32>
    %cst_23 = arith.constant 3.200000e+01 : f32
    %45 = vector.broadcast %cst_23 : f32 to vector<8x1xf32>
    %46 = arith.divf %44, %45 : vector<8x1xf32>
    %cst_24 = arith.constant 9.99999974E-6 : f32
    %47 = vector.broadcast %cst_24 : f32 to vector<8x1xf32>
    %48 = arith.addf %46, %47 : vector<8x1xf32>
    %49 = math.rsqrt %48 : vector<8x1xf32>
    %50 = vector.broadcast %49 : vector<8x1xf32> to vector<8x32xf32>
    %51 = arith.mulf %41, %50 : vector<8x32xf32>
    %c0_25 = arith.constant 0 : index
    %c0_26 = arith.constant 0 : index
    %52 = vector.load %arg8[%c0_25, %c0_26] : memref<1x32xf32, #tpu.memory_space<vmem>>, vector<1x32xf32>
    %53 = vector.broadcast %52 : vector<1x32xf32> to vector<8x32xf32>
    %54 = arith.mulf %51, %53 : vector<8x32xf32>
    %c0_27 = arith.constant 0 : index
    %c0_28 = arith.constant 0 : index
    %55 = vector.load %arg9[%c0_27, %c0_28] : memref<1x32xf32, #tpu.memory_space<vmem>>, vector<1x32xf32>
    %56 = vector.broadcast %55 : vector<1x32xf32> to vector<8x32xf32>
    %57 = arith.addf %54, %56 : vector<8x32xf32>
    %cst_29 = arith.constant 0.000000e+00 : f32
    %58 = vector.broadcast %cst_29 : f32 to vector<8x32xf32>
    %59 = arith.maximumf %57, %58 : vector<8x32xf32>
    %60 = arith.truncf %59 : vector<8x32xf32> to vector<8x32xbf16>
    %c0_30 = arith.constant 0 : index
    %c0_31 = arith.constant 0 : index
    %61 = vector.load %arg10[%c0_30, %c0_31] : memref<32x128xbf16, #tpu.memory_space<vmem>>, vector<32x128xbf16>
    %cst_32 = arith.constant dense<0.000000e+00> : vector<8x128xf32>
    %62 = tpu.matmul %60, %61, %cst_32 {dimension_numbers = #tpu.dot_dimension_numbers<[1], [0], [0], [1], [0, 0, 1, 1], [], []>} : vector<8x32xbf16>, vector<32x128xbf16>, vector<8x128xf32> -> vector<8x128xf32>
    %c0_33 = arith.constant 0 : index
    %c0_34 = arith.constant 0 : index
    %63 = vector.load %arg11[%c0_33, %c0_34] : memref<1x128xf32, #tpu.memory_space<vmem>>, vector<1x128xf32>
    %64 = vector.broadcast %63 : vector<1x128xf32> to vector<8x128xf32>
    %65 = arith.addf %62, %64 : vector<8x128xf32>
    %c0_35 = arith.constant 0 : index
    %c0_36 = arith.constant 0 : index
    %66 = vector.load %arg12[%c0_35, %c0_36] : memref<8x128xf32, #tpu.memory_space<vmem>>, vector<8x128xf32>
    tpu.vector_store %arg12[%c0_35, %c0_36], %65 {strides = array<i32>} : memref<8x128xf32, #tpu.memory_space<vmem>>, vector<8x128xf32>,
    return
  }
  func.func @transform_0(%arg0: i32) -> (i32, i32) {
    %c0_i32 = arith.constant 0 : i32
    %c0_i32_0 = arith.constant 0 : i32
    return %arg0, %c0_i32 : i32, i32
  }
  func.func @transform_1(%arg0: i32) -> (i32, i32) {
    %c0_i32 = arith.constant 0 : i32
    %c0_i32_0 = arith.constant 0 : i32
    %c0_i32_1 = arith.constant 0 : i32
    return %c0_i32, %c0_i32_0 : i32, i32
  }
  func.func @transform_2(%arg0: i32) -> (i32, i32) {
    %c0_i32 = arith.constant 0 : i32
    %c0_i32_0 = arith.constant 0 : i32
    %c0_i32_1 = arith.constant 0 : i32
    return %c0_i32, %c0_i32_0 : i32, i32
  }
  func.func @transform_3(%arg0: i32) -> (i32, i32) {
    %c0_i32 = arith.constant 0 : i32
    %c0_i32_0 = arith.constant 0 : i32
    %c0_i32_1 = arith.constant 0 : i32
    return %c0_i32, %c0_i32_0 : i32, i32
  }
  func.func @transform_4(%arg0: i32) -> (i32, i32) {
    %c0_i32 = arith.constant 0 : i32
    %c0_i32_0 = arith.constant 0 : i32
    %c0_i32_1 = arith.constant 0 : i32
    return %c0_i32, %c0_i32_0 : i32, i32
  }
  func.func @transform_5(%arg0: i32) -> (i32, i32) {
    %c0_i32 = arith.constant 0 : i32
    %c0_i32_0 = arith.constant 0 : i32
    %c0_i32_1 = arith.constant 0 : i32
    return %c0_i32, %c0_i32_0 : i32, i32
  }
  func.func @transform_6(%arg0: i32) -> (i32, i32) {
    %c0_i32 = arith.constant 0 : i32
    %c0_i32_0 = arith.constant 0 : i32
    %c0_i32_1 = arith.constant 0 : i32
    return %c0_i32, %c0_i32_0 : i32, i32
  }
  func.func @transform_7(%arg0: i32) -> (i32, i32) {
    %c0_i32 = arith.constant 0 : i32
    %c0_i32_0 = arith.constant 0 : i32
    %c0_i32_1 = arith.constant 0 : i32
    return %c0_i32, %c0_i32_0 : i32, i32
  }
  func.func @transform_8(%arg0: i32) -> (i32, i32) {
    %c0_i32 = arith.constant 0 : i32
    %c0_i32_0 = arith.constant 0 : i32
    %c0_i32_1 = arith.constant 0 : i32
    return %c0_i32, %c0_i32_0 : i32, i32
  }
  func.func @transform_9(%arg0: i32) -> (i32, i32) {
    %c0_i32 = arith.constant 0 : i32
    %c0_i32_0 = arith.constant 0 : i32
    %c0_i32_1 = arith.constant 0 : i32
    return %c0_i32, %c0_i32_0 : i32, i32
  }
  func.func @transform_10(%arg0: i32) -> (i32, i32) {
    %c0_i32 = arith.constant 0 : i32
    %c0_i32_0 = arith.constant 0 : i32
    %c0_i32_1 = arith.constant 0 : i32
    return %c0_i32, %c0_i32_0 : i32, i32
  }
  func.func @transform_11(%arg0: i32) -> (i32, i32) {
    %c0_i32 = arith.constant 0 : i32
    %c0_i32_0 = arith.constant 0 : i32
    return %arg0, %c0_i32 : i32, i32
  }
}

</mosaic_0001>

<llo_original>
// kernel: mlp_forward_pallas.1
$region0: #{mlp_forward_pallas.1}
  #allocation0 [shape = 'u32[]', space=smem, size = 0x4, offset = 0x4, fixed_abs, tag = 'smem constant byte address 0x4 - core index']
  #allocation1 [shape = 'u32[144,128]{1,0:T(1,128)}', space=vmem, size = 0x12000, scoped, tag = 'internal scratch']
  %s0 = inlined_call_operand.vmem [shape: bf16[8,128], index: 0, kind: input, shape index: {}]
  %s1 = inlined_call_operand.vmem [shape: bf16[128,64], index: 1, kind: input, shape index: {}]
  %s2 = inlined_call_operand.vmem [shape: f32[1,64], index: 2, kind: input, shape index: {}]
  %s3 = inlined_call_operand.vmem [shape: f32[1,64], index: 3, kind: input, shape index: {}]
  %s4 = inlined_call_operand.vmem [shape: f32[1,64], index: 4, kind: input, shape index: {}]
  %s5 = inlined_call_operand.vmem [shape: bf16[64,32], index: 5, kind: input, shape index: {}]
  %s6 = inlined_call_operand.vmem [shape: f32[1,32], index: 6, kind: input, shape index: {}]
  %s7 = inlined_call_operand.vmem [shape: f32[1,32], index: 7, kind: input, shape index: {}]
  %s8 = inlined_call_operand.vmem [shape: f32[1,32], index: 8, kind: input, shape index: {}]
  %s9 = inlined_call_operand.vmem [shape: bf16[32,128], index: 9, kind: input, shape index: {}]
  %s10 = inlined_call_operand.vmem [shape: f32[1,128], index: 10, kind: input, shape index: {}]
  %s11 = inlined_call_operand.hbm [shape: f32[8,128], index: 11, kind: output, shape index: {}]
  %s12 = sld [smem:[#allocation0]]
  $region54: #{mlp_forward_pallas.1} parent=0
    _
  %s14 = ssub.s32 1, %s12
  %s15 = scalar_select 0, %s14, %s12
  $region1: #{mlp_forward_pallas.1} parent=0
    #allocation2 [shape = 'u8[4096]{0}', space=vmem, size = 0x1000, scoped, tag = 'output window, operand 0, single buffered']
    #allocation3 [shape = 's32[1]{0}', space=sflag, size = 0x4, scoped, tag = 'scoped memory for mlp_forward_pallas.1']
    %16 = vsyncpa [#allocation3], 0
    // Predicated region
    $region2: #{mlp_forward_pallas.1} parent=1 // pred_check
      _
    $region3: #{mlp_forward_pallas.1} parent=1 // pred_check_branch
      %18 = sbr.rel (0) target = $region5
    $region4: #{mlp_forward_pallas.1} parent=1 // pred_region
      _
    $region5: #{mlp_forward_pallas.1} parent=1 // pred_fallthru
      _
    // Predicated region
    $region6: #{mlp_forward_pallas.1} parent=1 // pred_check
      _
    $region7: #{mlp_forward_pallas.1} parent=1 // pred_check_branch
      %20 = sbr.rel (0) target = $region9
    $region8: #{mlp_forward_pallas.1} parent=1 // pred_region
      _
    $region9: #{mlp_forward_pallas.1} parent=1 // pred_fallthru
      _
    // Predicated region
    $region10: #{mlp_forward_pallas.1} parent=1 // pred_check
      _
    $region11: #{mlp_forward_pallas.1} parent=1 // pred_check_branch
      %22 = sbr.rel (0) target = $region13
    $region12: #{mlp_forward_pallas.1} parent=1 // pred_region
      _
    $region13: #{mlp_forward_pallas.1} parent=1 // pred_fallthru
      _
    // Predicated region
    $region14: #{mlp_forward_pallas.1} parent=1 // pred_check
      _
    $region15: #{mlp_forward_pallas.1} parent=1 // pred_check_branch
      %24 = sbr.rel (0) target = $region17
    $region16: #{mlp_forward_pallas.1} parent=1 // pred_region
      _
    $region17: #{mlp_forward_pallas.1} parent=1 // pred_fallthru
      _
    // Predicated region
    $region18: #{mlp_forward_pallas.1} parent=1 // pred_check
      _
    $region19: #{mlp_forward_pallas.1} parent=1 // pred_check_branch
      %26 = sbr.rel (0) target = $region21
    $region20: #{mlp_forward_pallas.1} parent=1 // pred_region
      _
    $region21: #{mlp_forward_pallas.1} parent=1 // pred_fallthru
      _
    // Predicated region
    $region22: #{mlp_forward_pallas.1} parent=1 // pred_check
      _
    $region23: #{mlp_forward_pallas.1} parent=1 // pred_check_branch
      %28 = sbr.rel (0) target = $region25
    $region24: #{mlp_forward_pallas.1} parent=1 // pred_region
      _
    $region25: #{mlp_forward_pallas.1} parent=1 // pred_fallthru
      _
    // Predicated region
    $region26: #{mlp_forward_pallas.1} parent=1 // pred_check
      _
    $region27: #{mlp_forward_pallas.1} parent=1 // pred_check_branch
      %30 = sbr.rel (0) target = $region29
    $region28: #{mlp_forward_pallas.1} parent=1 // pred_region
      _
    $region29: #{mlp_forward_pallas.1} parent=1 // pred_fallthru
      _
    // Predicated region
    $region30: #{mlp_forward_pallas.1} parent=1 // pred_check
      _
    $region31: #{mlp_forward_pallas.1} parent=1 // pred_check_branch
      %32 = sbr.rel (0) target = $region33
    $region32: #{mlp_forward_pallas.1} parent=1 // pred_region
      _
    $region33: #{mlp_forward_pallas.1} parent=1 // pred_fallthru
      _
    // Predicated region
    $region34: #{mlp_forward_pallas.1} parent=1 // pred_check
      _
    $region35: #{mlp_forward_pallas.1} parent=1 // pred_check_branch
      %34 = sbr.rel (0) target = $region37
    $region36: #{mlp_forward_pallas.1} parent=1 // pred_region
      _
    $region37: #{mlp_forward_pallas.1} parent=1 // pred_fallthru
      _
    // Predicated region
    $region38: #{mlp_forward_pallas.1} parent=1 // pred_check
      _
    $region39: #{mlp_forward_pallas.1} parent=1 // pred_check_branch
      %36 = sbr.rel (0) target = $region41
    $region40: #{mlp_forward_pallas.1} parent=1 // pred_region
      _
    $region41: #{mlp_forward_pallas.1} parent=1 // pred_fallthru
      _
    // Predicated region
    $region42: #{mlp_forward_pallas.1} parent=1 // pred_check
      _
    $region43: #{mlp_forward_pallas.1} parent=1 // pred_check_branch
      %38 = sbr.rel (0) target = $region45
    $region44: #{mlp_forward_pallas.1} parent=1 // pred_region
      _
    $region45: #{mlp_forward_pallas.1} parent=1 // pred_fallthru
      _
    %v40 = vld [vmem:[%s0] sm:$0xf]
    %v41 = vld [vmem:[%s1] sm:$0xf]
    %v42 = vld [vmem:[%s1 + $0x4] sm:$0xf]
    %v43 = vld [vmem:[%s1 + $0x8] sm:$0xf]
    %v44 = vld [vmem:[%s1 + $0xc] sm:$0xf]
    %v45 = vld [vmem:[%s1 + $0x10] sm:$0xf]
    %v46 = vld [vmem:[%s1 + $0x14] sm:$0xf]
    %v47 = vld [vmem:[%s1 + $0x18] sm:$0xf]
    %v48 = vld [vmem:[%s1 + $0x1c] sm:$0xf]
    %v49 = vld [vmem:[%s1 + $0x20] sm:$0xf]
    %v50 = vld [vmem:[%s1 + $0x24] sm:$0xf]
    %v51 = vld [vmem:[%s1 + $0x28] sm:$0xf]
    %v52 = vld [vmem:[%s1 + $0x2c] sm:$0xf]
    %v53 = vld [vmem:[%s1 + $0x30] sm:$0xf]
    %v54 = vld [vmem:[%s1 + $0x34] sm:$0xf]
    %v55 = vld [vmem:[%s1 + $0x38] sm:$0xf]
    %v56 = vld [vmem:[%s1 + $0x3c] sm:$0xf]
    %v57 = vld [vmem:[%s2] sm:$0x1]
    %v59 = vlaneseq
    %v60 = vshrl.u32 %v59, 7
    %v61 = vsub.s32 0, %v60
    %v62 = vrot.slane %v57, %v61
    %v80 = vunpack.c.l.b16 %v41
    %v81 = vunpack.c.l.b16 %v42
    %v82 = vunpack.c.l.b16 %v43
    %v83 = vunpack.c.l.b16 %v44
    %v84 = vunpack.c.l.b16 %v45
    %v85 = vunpack.c.l.b16 %v46
    %v86 = vunpack.c.l.b16 %v47
    %v87 = vunpack.c.l.b16 %v48
    %v88 = vunpack.c.l.b16 %v49
    %v89 = vunpack.c.l.b16 %v50
    %v90 = vunpack.c.l.b16 %v51
    %v91 = vunpack.c.l.b16 %v52
    %v92 = vunpack.c.l.b16 %v53
    %v93 = vunpack.c.l.b16 %v54
    %v94 = vunpack.c.l.b16 %v55
    %v95 = vunpack.c.l.b16 %v56
    %v96 = vpack.c.b16 %v81, %v80
    %v97 = vpack.c.b16 %v83, %v82
    %v98 = vpack.c.b16 %v85, %v84
    %v99 = vpack.c.b16 %v87, %v86
    %v100 = vpack.c.b16 %v89, %v88
    %v101 = vpack.c.b16 %v91, %v90
    %v102 = vpack.c.b16 %v93, %v92
    %v103 = vpack.c.b16 %v95, %v94
    %112 = vmatprep.subr.bf16.mxu0 0
    %113 = vmatpush1.bf16.msra.mxu0 %v96
    %114 = vmatprep.subr.bf16.mxu0 0
    %115 = vmatpush1.bf16.msra.mxu0 %v97
    %116 = vmatprep.subr.bf16.mxu0 0
    %117 = vmatpush1.bf16.msra.mxu0 %v98
    %118 = vmatprep.subr.bf16.mxu0 0
    %119 = vmatpush1.bf16.msra.mxu0 %v99
    %120 = vmatprep.subr.bf16.mxu0 0
    %121 = vmatpush1.bf16.msra.mxu0 %v100
    %122 = vmatprep.subr.bf16.mxu0 0
    %123 = vmatpush1.bf16.msra.mxu0 %v101
    %124 = vmatprep.subr.bf16.mxu0 0
    %125 = vmatpush1.bf16.msra.mxu0 %v102
    %126 = vmatprep.subr.bf16.mxu0 0
    %127 = vmatpush1.bf16.msra.mxu0 %v103
    %128 = vmatprep.subr.bf16.mxu0 0
    %129 = vmatpush1.bf16.msra.mxu0 0
    %130 = vmatprep.subr.bf16.mxu0 0
    %131 = vmatpush1.bf16.msra.mxu0 0
    %132 = vmatprep.subr.bf16.mxu0 0
    %133 = vmatpush1.bf16.msra.mxu0 0
    %134 = vmatprep.subr.bf16.mxu0 0
    %135 = vmatpush1.bf16.msra.mxu0 0
    %136 = vmatprep.subr.bf16.mxu0 0
    %137 = vmatpush1.bf16.msra.mxu0 0
    %138 = vmatprep.subr.bf16.mxu0 0
    %139 = vmatpush1.bf16.msra.mxu0 0
    %140 = vmatprep.subr.bf16.mxu0 0
    %141 = vmatpush1.bf16.msra.mxu0 0
    %142 = vmatprep.subr.bf16.mxu0 0
    %143 = vmatpush1.bf16.msra.mxu0 0
    %144 = vmatprep.mubr.bf16.mxu0 0
    %145 = vmatmul.mubr.bf16.gmra.mrb[0].mxu0 %v40
    %v146 = vpop.f32.mrb[0].mxu0
    %v147 = vadd.f32 %v62, %v146
    %v148 = vpop.f32.mrb[0].mxu0
    %v149 = vpop.f32.mrb[0].mxu0
    %v150 = vpop.f32.mrb[0].mxu0
    %151 = vdwg.mxu0
    %vm152 = vcmask 523264
    %v153 = vsel %vm152, %v147, 0.0
    %154 = vadd.xlane.f32.xlu0 %v153
    %v155 = vpop.xlane.xlu0 %154
    %v156 = vrcp.pop 64.0
    %v157 = vmul.f32 %v155, %v156
    %v158 = vsub.f32 %v147, %v157
    %v159 = vmul.f32 %v158, %v158
    %v160 = vsel %vm152, %v159, 0.0
    %161 = vadd.xlane.f32.xlu0 %v160
    %v162 = vpop.xlane.xlu0 %161
    %v163 = vmul.f32 %v162, %v156
    %v164 = vadd.f32 %v163, 1e-05
    %v165 = vrsqrt.pop %v164
    %v166 = vmul.f32 %v158, %v165
    %v167 = vld [vmem:[%s3] sm:$0x1]
    %v169 = vlaneseq
    %v170 = vshrl.u32 %v169, 7
    %v171 = vsub.s32 0, %v170
    %v172 = vrot.slane %v167, %v171
    %v174 = vmul.f32 %v166, %v172
    %v175 = vld [vmem:[%s4] sm:$0x1]
    %v177 = vlaneseq
    %v178 = vshrl.u32 %v177, 7
    %v179 = vsub.s32 0, %v178
    %v180 = vrot.slane %v175, %v179
    %v182 = vadd.f32 %v174, %v180
    %v183 = vmax.f32 %v182, 0.0
    %v184 = vpack.c.bf16 %v183, %v183
    %v185 = vld [vmem:[%s5] sm:$0xf]
    %v186 = vld [vmem:[%s5 + $0x4] sm:$0xf]
    %v187 = vld [vmem:[%s5 + $0x8] sm:$0xf]
    %v188 = vld [vmem:[%s5 + $0xc] sm:$0xf]
    %v189 = vld [vmem:[%s5 + $0x10] sm:$0xf]
    %v190 = vld [vmem:[%s5 + $0x14] sm:$0xf]
    %v191 = vld [vmem:[%s5 + $0x18] sm:$0xf]
    %v192 = vld [vmem:[%s5 + $0x1c] sm:$0xf]
    %v193 = vld [vmem:[%s6] sm:$0x1]
    %v195 = vlaneseq
    %v196 = vshrl.u32 %v195, 7
    %v197 = vsub.s32 0, %v196
    %v198 = vrot.slane %v193, %v197
    %v208 = vunpack.c.l.b16 %v185
    %v209 = vunpack.c.l.b16 %v186
    %v210 = vunpack.c.l.b16 %v187
    %v211 = vunpack.c.l.b16 %v188
    %v212 = vunpack.c.l.b16 %v189
    %v213 = vunpack.c.l.b16 %v190
    %v214 = vunpack.c.l.b16 %v191
    %v215 = vunpack.c.l.b16 %v192
    %v216 = vpack.c.b16 %v209, %v208
    %v217 = vpack.c.b16 %v211, %v210
    %v218 = vpack.c.b16 %v213, %v212
    %v219 = vpack.c.b16 %v215, %v214
    %v225 = vsel %vm152, %v184, 0
    %227 = vmatprep.subr.bf16.mxu0 0
    %228 = vmatpush1.bf16.msra.mxu0 %v216
    %229 = vmatprep.subr.bf16.mxu0 0
    %230 = vmatpush1.bf16.msra.mxu0 %v217
    %231 = vmatprep.subr.bf16.mxu0 0
    %232 = vmatpush1.bf16.msra.mxu0 %v218
    %233 = vmatprep.subr.bf16.mxu0 0
    %234 = vmatpush1.bf16.msra.mxu0 %v219
    %235 = vmatprep.subr.bf16.mxu0 0
    %236 = vmatpush1.bf16.msra.mxu0 0
    %237 = vmatprep.subr.bf16.mxu0 0
    %238 = vmatpush1.bf16.msra.mxu0 0
    %239 = vmatprep.subr.bf16.mxu0 0
    %240 = vmatpush1.bf16.msra.mxu0 0
    %241 = vmatprep.subr.bf16.mxu0 0
    %242 = vmatpush1.bf16.msra.mxu0 0
    %243 = vmatprep.subr.bf16.mxu0 0
    %244 = vmatpush1.bf16.msra.mxu0 0
    %245 = vmatprep.subr.bf16.mxu0 0
    %246 = vmatpush1.bf16.msra.mxu0 0
    %247 = vmatprep.subr.bf16.mxu0 0
    %248 = vmatpush1.bf16.msra.mxu0 0
    %249 = vmatprep.subr.bf16.mxu0 0
    %250 = vmatpush1.bf16.msra.mxu0 0
    %251 = vmatprep.subr.bf16.mxu0 0
    %252 = vmatpush1.bf16.msra.mxu0 0
    %253 = vmatprep.subr.bf16.mxu0 0
    %254 = vmatpush1.bf16.msra.mxu0 0
    %255 = vmatprep.subr.bf16.mxu0 0
    %256 = vmatpush1.bf16.msra.mxu0 0
    %257 = vmatprep.subr.bf16.mxu0 0
    %258 = vmatpush1.bf16.msra.mxu0 0
    %259 = vmatprep.mubr.bf16.mxu0 0
    %260 = vmatmul.mubr.bf16.gmra.mrb[0].mxu0 %v225
    %v261 = vpop.f32.mrb[0].mxu0
    %v262 = vadd.f32 %v198, %v261
    %v263 = vpop.f32.mrb[0].mxu0
    %v264 = vpop.f32.mrb[0].mxu0
    %v265 = vpop.f32.mrb[0].mxu0
    %266 = vdwg.mxu0
    %vm267 = vcmask 261120
    %v268 = vsel %vm267, %v262, 0.0
    %269 = vadd.xlane.f32.xlu0 %v268
    %v270 = vpop.xlane.xlu0 %269
    %v271 = vrcp.pop 32.0
    %v272 = vmul.f32 %v270, %v271
    %v273 = vsub.f32 %v262, %v272
    %v274 = vmul.f32 %v273, %v273
    %v275 = vsel %vm267, %v274, 0.0
    %276 = vadd.xlane.f32.xlu0 %v275
    %v277 = vpop.xlane.xlu0 %276
    %v278 = vmul.f32 %v277, %v271
    %v279 = vadd.f32 %v278, 1e-05
    %v280 = vrsqrt.pop %v279
    %v281 = vmul.f32 %v273, %v280
    %v282 = vld [vmem:[%s7] sm:$0x1]
    %v284 = vlaneseq
    %v285 = vshrl.u32 %v284, 7
    %v286 = vsub.s32 0, %v285
    %v287 = vrot.slane %v282, %v286
    %v289 = vmul.f32 %v281, %v287
    %v290 = vld [vmem:[%s8] sm:$0x1]
    %v292 = vlaneseq
    %v293 = vshrl.u32 %v292, 7
    %v294 = vsub.s32 0, %v293
    %v295 = vrot.slane %v290, %v294
    %v297 = vadd.f32 %v289, %v295
    %v298 = vmax.f32 %v297, 0.0
    %v299 = vpack.c.bf16 %v298, %v298
    %v300 = vld [vmem:[%s9] sm:$0xf]
    %v301 = vld [vmem:[%s9 + $0x4] sm:$0xf]
    %v302 = vld [vmem:[%s9 + $0x8] sm:$0xf]
    %v303 = vld [vmem:[%s9 + $0xc] sm:$0xf]
    %v304 = vld [vmem:[%s10] sm:$0x1]
    %v306 = vlaneseq
    %v307 = vshrl.u32 %v306, 7
    %v308 = vsub.s32 0, %v307
    %v309 = vrot.slane %v304, %v308
    %v315 = vunpack.c.l.b16 %v300
    %v316 = vunpack.c.l.b16 %v301
    %v317 = vunpack.c.l.b16 %v302
    %v318 = vunpack.c.l.b16 %v303
    %v319 = vpack.c.b16 %v316, %v315
    %v320 = vpack.c.b16 %v318, %v317
    %v324 = vsel %vm267, %v299, 0
    %326 = vmatprep.subr.bf16.mxu0 0
    %327 = vmatpush1.bf16.msra.mxu0 %v319
    %328 = vmatprep.subr.bf16.mxu0 0
    %329 = vmatpush1.bf16.msra.mxu0 %v320
    %330 = vmatprep.subr.bf16.mxu0 0
    %331 = vmatpush1.bf16.msra.mxu0 0
    %332 = vmatprep.subr.bf16.mxu0 0
    %333 = vmatpush1.bf16.msra.mxu0 0
    %334 = vmatprep.subr.bf16.mxu0 0
    %335 = vmatpush1.bf16.msra.mxu0 0
    %336 = vmatprep.subr.bf16.mxu0 0
    %337 = vmatpush1.bf16.msra.mxu0 0
    %338 = vmatprep.subr.bf16.mxu0 0
    %339 = vmatpush1.bf16.msra.mxu0 0
    %340 = vmatprep.subr.bf16.mxu0 0
    %341 = vmatpush1.bf16.msra.mxu0 0
    %342 = vmatprep.subr.bf16.mxu0 0
    %343 = vmatpush1.bf16.msra.mxu0 0
    %344 = vmatprep.subr.bf16.mxu0 0
    %345 = vmatpush1.bf16.msra.mxu0 0
    %346 = vmatprep.subr.bf16.mxu0 0
    %347 = vmatpush1.bf16.msra.mxu0 0
    %348 = vmatprep.subr.bf16.mxu0 0
    %349 = vmatpush1.bf16.msra.mxu0 0
    %350 = vmatprep.subr.bf16.mxu0 0
    %351 = vmatpush1.bf16.msra.mxu0 0
    %352 = vmatprep.subr.bf16.mxu0 0
    %353 = vmatpush1.bf16.msra.mxu0 0
    %354 = vmatprep.subr.bf16.mxu0 0
    %355 = vmatpush1.bf16.msra.mxu0 0
    %356 = vmatprep.subr.bf16.mxu0 0
    %357 = vmatpush1.bf16.msra.mxu0 0
    %358 = vmatprep.mubr.bf16.mxu0 0
    %359 = vmatmul.mubr.bf16.gmra.mrb[0].mxu0 %v324
    %v360 = vpop.f32.mrb[0].mxu0
    %v361 = vadd.f32 %v309, %v360
    %v362 = vpop.f32.mrb[0].mxu0
    %v363 = vpop.f32.mrb[0].mxu0
    %v364 = vpop.f32.mrb[0].mxu0
    %365 = vdwg.mxu0
    %366 = vst [vmem:[#allocation2] sm:$0xff] %v361
    // Predicated region
    $region46: #{mlp_forward_pallas.1} parent=1 // pred_check
      _
    $region47: #{mlp_forward_pallas.1} parent=1 // pred_check_branch
      %368 = sbr.rel (0) target = $region49
    $region48: #{mlp_forward_pallas.1} parent=1 // pred_region
      %s370 = ssub.s32 128, 128
      %371 = vsyncadd [#allocation3], %s370
      %s373 = sshll.u32 [#allocation2], 4
      %s374 = int_to_ptr.vmem [resolvable:$true] %s373
      %376 = dma.vmem_to_hbm [thread:$0]  %s374, 128, %s11, [#allocation3]
    $region49: #{mlp_forward_pallas.1} parent=1 // pred_fallthru
      _
    // Predicated region
    $region50: #{mlp_forward_pallas.1} parent=1 // pred_check
      _
    $region51: #{mlp_forward_pallas.1} parent=1 // pred_check_branch
      %378 = sbr.rel (0) target = $region53
    $region52: #{mlp_forward_pallas.1} parent=1 // pred_region
      %379 = dma.done [#allocation3], 128
    $region53: #{mlp_forward_pallas.1} parent=1 // pred_fallthru
      _
    %380 = vsyncpa [#allocation3], 1

</llo_original>
